<compile_context>
chip_gen: v7x
topology: tpu7x:2x2x1
jax: 0.10.0
libtpu: 0.0.40
codegen_flags: <defaults>
</compile_context>

<pallas_src>
import functools

import jax
import jax.numpy as jnp
from jax.experimental import pallas as pl
from jax.experimental.pallas import tpu as pltpu

LANE = 128
SUBLANE_BF16 = 16   # bf16 packs 16 sublanes per vreg


def _round_up(x, m):
    return ((x + m - 1) // m) * m


def _cdiv(a, b):
    return -(-a // b)


def sac_actor_kernel(x_ref, w1_ref, b1_ref, w2_ref, b2_ref, w3_ref, b3_ref,
                     probs_ref):
    A = probs_ref.shape[-1]                      # real action_dims (e.g. 8)
    # Cast f32 -> bf16 in-kernel: input stays at its real 32-lane width in HBM.
    x = x_ref[...].astype(jnp.bfloat16)                              # [TB, S]
    h1 = jnp.dot(x, w1_ref[...], preferred_element_type=jnp.float32)
    h1 = jnp.maximum(h1 + b1_ref[...], 0.0)                          # f32 [TB, H_p]
    h2 = jnp.dot(h1.astype(jnp.bfloat16), w2_ref[...],
                 preferred_element_type=jnp.float32)
    h2 = jnp.maximum(h2 + b2_ref[...], 0.0)
    logits = jnp.dot(h2.astype(jnp.bfloat16), w3_ref[...],
                     preferred_element_type=jnp.float32)
    logits = logits + b3_ref[...]        # padded action lanes carry -1e30 bias
    # Numerically stable softmax over the (lane-dense, padded) last dim.
    m = jnp.max(logits, axis=-1, keepdims=True)
    e = jnp.exp(logits - m)
    denom = jnp.sum(e, axis=-1, keepdims=True)
    probs = e / denom                     # exact divide: kernel is not EUP-bound
    # Store only the real action lanes -> ~16x less HBM writeback.
    probs_ref[...] = probs[:, :A]


@functools.partial(jax.jit, static_argnames=("action_dims", "batch_tile"))
def sac_forward(state, prepared_params, *, action_dims, batch_tile=2048):
    """SAC.forward(state): Categorical probabilities, shape [B, action_dims]."""
    w1_p, b1_p, w2_p, b2_p, w3_p, b3_p = prepared_params
    B, S = state.shape
    H_p = w1_p.shape[1]
    A_p = w3_p.shape[1]
    A = action_dims

    # --- batch tiling --------------------------------------------------------
    # Large tiles (grid-step overhead dominates this tiny MLP); keep >= 2 tiles
    # when the batch is big enough so ("parallel",) shards across v7x's 2 TCs.
    B16 = _round_up(B, SUBLANE_BF16)
    if B16 >= 256:
        n_tiles = max(2, _cdiv(B16, batch_tile))
    else:
        n_tiles = 1
    TB = _round_up(_cdiv(B16, n_tiles), SUBLANE_BF16)
    B_p = TB * n_tiles

    x = state if B_p == B else jnp.pad(state, ((0, B_p - B), (0, 0)))

    in_specs = [
        pl.BlockSpec((TB, S), lambda i: (i, 0)),     # state: batch-tiled, real last dim
        pl.BlockSpec((S, H_p), lambda i: (0, 0)),    # weights / biases: constant
        pl.BlockSpec((1, H_p), lambda i: (0, 0)),    #   index_map -> fetched once,
        pl.BlockSpec((H_p, H_p), lambda i: (0, 0)),  #   VMEM-resident across the grid
        pl.BlockSpec((1, H_p), lambda i: (0, 0)),
        pl.BlockSpec((H_p, A_p), lambda i: (0, 0)),
        pl.BlockSpec((1, A_p), lambda i: (0, 0)),
    ]
    # Real-width output block (last dim == full array dim A): masked store but
    # far fewer HBM bytes than a 128-lane padded output.
    out_spec = pl.BlockSpec((TB, A), lambda i: (i, 0))

    # --- VMEM budget (generation-aware) --------------------------------------
    resident = sum(int(p.size) * p.dtype.itemsize
                   for p in (w1_p, b1_p, w2_p, b2_p, w3_p, b3_p))
    io_tiles = 2 * (TB * LANE * 4) + 2 * (TB * LANE * 4)  # x / probs, 2 bufs, lane-padded physical
    scratch = 8 * TB * H_p * 4                            # f32 activation temporaries
    need = 2 * resident + io_tiles + scratch
    try:
        phys_vmem = int(pltpu.get_tpu_info().vmem_capacity_bytes)
    except Exception:
        phys_vmem = 64 << 20                              # conservative (v7x per-TC)
    vmem_limit = int(min(max(2 * need, 32 << 20), (phys_vmem * 3) // 4))

    flops = 2 * B_p * (S * H_p + H_p * H_p + H_p * A_p)
    bytes_accessed = int(B_p * S * 4 + resident + B_p * A * 4)
    cost = pl.CostEstimate(flops=flops, transcendentals=B_p * A_p,
                           bytes_accessed=bytes_accessed)

    out = pl.pallas_call(
        sac_actor_kernel,
        out_shape=jax.ShapeDtypeStruct((B_p, A), jnp.float32),
        grid=(n_tiles,),
        in_specs=in_specs,
        out_specs=out_spec,
        compiler_params=pltpu.CompilerParams(
            dimension_semantics=("parallel",),   # batch tiles -> both TCs on v7x
            vmem_limit_bytes=vmem_limit),
        cost_estimate=cost,
    )(x, w1_p, b1_p, w2_p, b2_p, w3_p, b3_p)

    return out[:B]


def prepare_params(params):
    """One-time pad/cast of the actor params (hoisted out of the per-call path):
    weights -> bf16 MXU operands with hidden/action dims padded to the 128-lane
    width; biases stay f32; padded action lanes get a -1e30 bias so they vanish
    under softmax."""
    w1, b1, w2, b2, w3, b3 = params
    S, H = w1.shape
    A = w3.shape[1]
    H_p = _round_up(H, LANE)
    A_p = _round_up(A, LANE)

    def pad2(a, rows, cols, fill=0.0):
        return jnp.pad(a, ((0, rows - a.shape[0]), (0, cols - a.shape[1])),
                       constant_values=fill)

    w1_p = pad2(w1, S, H_p).astype(jnp.bfloat16)       # state dim left unpadded
    w2_p = pad2(w2, H_p, H_p).astype(jnp.bfloat16)
    w3_p = pad2(w3, H_p, A_p).astype(jnp.bfloat16)
    b1_p = pad2(b1.astype(jnp.float32), 1, H_p)
    b2_p = pad2(b2.astype(jnp.float32), 1, H_p)
    b3_p = pad2(b3.astype(jnp.float32), 1, A_p, fill=-1e30)
    return (w1_p, b1_p, w2_p, b2_p, w3_p, b3_p)


def orthogonal(key, shape):
    """Deterministic orthogonal init (matches nn.init.orthogonal_ semantics)."""
    rows, cols = shape
    n = max(rows, cols)
    a = jax.random.normal(key, (n, n), dtype=jnp.float32)
    q, r = jnp.linalg.qr(a)
    d = jnp.diag(r)
    q = q * jnp.where(d >= 0, 1.0, -1.0)   # sign-fix (never zeros a column)
    return q[:rows, :cols]


def make_params(key, state_dims, action_dims, hidden_dims):
    k1, k2, k3 = jax.random.split(key, 3)
    # PyTorch nn.Linear weight is [out, in]; store the transpose [in, out] in f32.
    w1 = orthogonal(k1, (hidden_dims, state_dims)).T
    w2 = orthogonal(k2, (hidden_dims, hidden_dims)).T
    w3 = orthogonal(k3, (action_dims, hidden_dims)).T
    b1 = jnp.zeros((1, hidden_dims), jnp.float32)
    b2 = jnp.zeros((1, hidden_dims), jnp.float32)
    b3 = jnp.zeros((1, action_dims), jnp.float32)
    return (w1, b1, w2, b2, w3, b3)


def reference_forward(state, params):
    """Pure-JAX reference matching the kernel's bf16-operand / f32-accumulate flow."""
    w1, b1, w2, b2, w3, b3 = params
    hp = jax.lax.Precision.HIGHEST

    def mm(a, w):
        return jnp.dot(a.astype(jnp.bfloat16).astype(jnp.float32),
                       w.astype(jnp.bfloat16).astype(jnp.float32), precision=hp)

    h1 = jnp.maximum(mm(state, w1) + b1, 0.0)
    h2 = jnp.maximum(mm(h1, w2) + b2, 0.0)
    logits = mm(h2, w3) + b3
    return jax.nn.softmax(logits, axis=-1)


if __name__ == "__main__":
    B, STATE_DIMS, ACTION_DIMS, HIDDEN = 8, 32, 8, 32

    key = jax.random.PRNGKey(0)
    k_state, k_params = jax.random.split(key)

    state = jax.random.normal(k_state, (B, STATE_DIMS), dtype=jnp.float32)
    params = make_params(k_params, STATE_DIMS, ACTION_DIMS, HIDDEN)
    prepared = prepare_params(params)     # one-time pad/cast, out of per-call path

    probs = jax.block_until_ready(
        sac_forward(state, prepared, action_dims=ACTION_DIMS))
    ref = reference_forward(state, params)

    assert probs.shape == (B, ACTION_DIMS)
    assert bool(jnp.all(jnp.isfinite(probs)))
    assert bool(jnp.allclose(jnp.sum(probs, axis=-1), 1.0, atol=1e-5))
    assert bool(jnp.allclose(probs, ref, atol=1e-4, rtol=1e-3))

    # TODO(synk): Categorical.sample() (used in act()) needs RNG key plumbing and
    # is not part of forward(); omitted from the kernel.
    print("KERNEL_OK")
</pallas_src>

<mosaic_0001>
module attributes {stable_mosaic.version = 11 : i64} {
  func.func @sac_actor_kernel(%arg0: i32, %arg1: memref<16x32xf32, #tpu.memory_space<vmem>>, %arg2: memref<32x128xbf16, #tpu.memory_space<vmem>>, %arg3: memref<1x128xf32, #tpu.memory_space<vmem>>, %arg4: memref<128x128xbf16, #tpu.memory_space<vmem>>, %arg5: memref<1x128xf32, #tpu.memory_space<vmem>>, %arg6: memref<128x128xbf16, #tpu.memory_space<vmem>>, %arg7: memref<1x128xf32, #tpu.memory_space<vmem>>, %arg8: memref<16x8xf32, #tpu.memory_space<vmem>>) attributes {dimension_semantics = [#tpu.dimension_semantics<parallel>], iteration_bounds = array<i64: 1>, scalar_prefetch = 0 : i64, scratch_operands = 0 : i64, tpu.core_type = #tpu.core_type<tc>, window_params = [{transform_indices = @transform_0, window_bounds = array<i64: 16, 32>}, {pipeline_mode = #tpu.pipeline_mode<synchronous>, transform_indices = @transform_1, window_bounds = array<i64: 32, 128>}, {pipeline_mode = #tpu.pipeline_mode<synchronous>, transform_indices = @transform_2, window_bounds = array<i64: 1, 128>}, {pipeline_mode = #tpu.pipeline_mode<synchronous>, transform_indices = @transform_3, window_bounds = array<i64: 128, 128>}, {pipeline_mode = #tpu.pipeline_mode<synchronous>, transform_indices = @transform_4, window_bounds = array<i64: 1, 128>}, {pipeline_mode = #tpu.pipeline_mode<synchronous>, transform_indices = @transform_5, window_bounds = array<i64: 128, 128>}, {pipeline_mode = #tpu.pipeline_mode<synchronous>, transform_indices = @transform_6, window_bounds = array<i64: 1, 128>}, {transform_indices = @transform_7, window_bounds = array<i64: 16, 8>}]} {
    %c0 = arith.constant 0 : index
    %c0_0 = arith.constant 0 : index
    %0 = vector.load %arg1[%c0, %c0_0] : memref<16x32xf32, #tpu.memory_space<vmem>>, vector<16x32xf32>
    %1 = arith.truncf %0 : vector<16x32xf32> to vector<16x32xbf16>
    %c0_1 = arith.constant 0 : index
    %c0_2 = arith.constant 0 : index
    %2 = vector.load %arg2[%c0_1, %c0_2] : memref<32x128xbf16, #tpu.memory_space<vmem>>, vector<32x128xbf16>
    %cst = arith.constant dense<0.000000e+00> : vector<16x128xf32>
    %3 = tpu.matmul %1, %2, %cst {dimension_numbers = #tpu.dot_dimension_numbers<[1], [0], [0], [1], [0, 0, 1, 1], [], []>} : vector<16x32xbf16>, vector<32x128xbf16>, vector<16x128xf32> -> vector<16x128xf32>
    %c0_3 = arith.constant 0 : index
    %c0_4 = arith.constant 0 : index
    %4 = vector.load %arg3[%c0_3, %c0_4] : memref<1x128xf32, #tpu.memory_space<vmem>>, vector<1x128xf32>
    %5 = vector.broadcast %4 : vector<1x128xf32> to vector<16x128xf32>
    %6 = arith.addf %3, %5 : vector<16x128xf32>
    %cst_5 = arith.constant 0.000000e+00 : f32
    %7 = vector.broadcast %cst_5 : f32 to vector<16x128xf32>
    %8 = arith.maximumf %6, %7 : vector<16x128xf32>
    %9 = arith.truncf %8 : vector<16x128xf32> to vector<16x128xbf16>
    %c0_6 = arith.constant 0 : index
    %c0_7 = arith.constant 0 : index
    %10 = vector.load %arg4[%c0_6, %c0_7] : memref<128x128xbf16, #tpu.memory_space<vmem>>, vector<128x128xbf16>
    %cst_8 = arith.constant dense<0.000000e+00> : vector<16x128xf32>
    %11 = tpu.matmul %9, %10, %cst_8 {dimension_numbers = #tpu.dot_dimension_numbers<[1], [0], [0], [1], [0, 0, 1, 1], [], []>} : vector<16x128xbf16>, vector<128x128xbf16>, vector<16x128xf32> -> vector<16x128xf32>
    %c0_9 = arith.constant 0 : index
    %c0_10 = arith.constant 0 : index
    %12 = vector.load %arg5[%c0_9, %c0_10] : memref<1x128xf32, #tpu.memory_space<vmem>>, vector<1x128xf32>
    %13 = vector.broadcast %12 : vector<1x128xf32> to vector<16x128xf32>
    %14 = arith.addf %11, %13 : vector<16x128xf32>
    %cst_11 = arith.constant 0.000000e+00 : f32
    %15 = vector.broadcast %cst_11 : f32 to vector<16x128xf32>
    %16 = arith.maximumf %14, %15 : vector<16x128xf32>
    %17 = arith.truncf %16 : vector<16x128xf32> to vector<16x128xbf16>
    %c0_12 = arith.constant 0 : index
    %c0_13 = arith.constant 0 : index
    %18 = vector.load %arg6[%c0_12, %c0_13] : memref<128x128xbf16, #tpu.memory_space<vmem>>, vector<128x128xbf16>
    %cst_14 = arith.constant dense<0.000000e+00> : vector<16x128xf32>
    %19 = tpu.matmul %17, %18, %cst_14 {dimension_numbers = #tpu.dot_dimension_numbers<[1], [0], [0], [1], [0, 0, 1, 1], [], []>} : vector<16x128xbf16>, vector<128x128xbf16>, vector<16x128xf32> -> vector<16x128xf32>
    %c0_15 = arith.constant 0 : index
    %c0_16 = arith.constant 0 : index
    %20 = vector.load %arg7[%c0_15, %c0_16] : memref<1x128xf32, #tpu.memory_space<vmem>>, vector<1x128xf32>
    %21 = vector.broadcast %20 : vector<1x128xf32> to vector<16x128xf32>
    %22 = arith.addf %19, %21 : vector<16x128xf32>
    %cst_17 = arith.constant dense<0xFF800000> : vector<16xf32>
    %23 = vector.multi_reduction <maximumf>, %22, %cst_17 [1] : vector<16x128xf32> to vector<16xf32>
    %24 = vector.shape_cast %23 : vector<16xf32> to vector<16x1xf32>
    %25 = vector.broadcast %24 : vector<16x1xf32> to vector<16x128xf32>
    %26 = arith.subf %22, %25 : vector<16x128xf32>
    %27 = math.exp %26 : vector<16x128xf32>
    %cst_18 = arith.constant dense<0.000000e+00> : vector<16xf32>
    %28 = vector.multi_reduction <add>, %27, %cst_18 [1] : vector<16x128xf32> to vector<16xf32>
    %29 = vector.shape_cast %28 : vector<16xf32> to vector<16x1xf32>
    %30 = vector.broadcast %29 : vector<16x1xf32> to vector<16x128xf32>
    %31 = arith.divf %27, %30 : vector<16x128xf32>
    %32 = vector.extract_strided_slice %31 {offsets = [0, 0], sizes = [16, 8], strides = [1, 1]} : vector<16x128xf32> to vector<16x8xf32>
    %c0_19 = arith.constant 0 : index
    %c0_20 = arith.constant 0 : index
    %33 = vector.load %arg8[%c0_19, %c0_20] : memref<16x8xf32, #tpu.memory_space<vmem>>, vector<16x8xf32>
    tpu.vector_store %arg8[%c0_19, %c0_20], %32 {strides = array<i32>} : memref<16x8xf32, #tpu.memory_space<vmem>>, vector<16x8xf32>,
    return
  }
  func.func @transform_0(%arg0: i32) -> (i32, i32) {
    %c0_i32 = arith.constant 0 : i32
    %c0_i32_0 = arith.constant 0 : i32
    return %arg0, %c0_i32 : i32, i32
  }
  func.func @transform_1(%arg0: i32) -> (i32, i32) {
    %c0_i32 = arith.constant 0 : i32
    %c0_i32_0 = arith.constant 0 : i32
    %c0_i32_1 = arith.constant 0 : i32
    return %c0_i32, %c0_i32_0 : i32, i32
  }
  func.func @transform_2(%arg0: i32) -> (i32, i32) {
    %c0_i32 = arith.constant 0 : i32
    %c0_i32_0 = arith.constant 0 : i32
    %c0_i32_1 = arith.constant 0 : i32
    return %c0_i32, %c0_i32_0 : i32, i32
  }
  func.func @transform_3(%arg0: i32) -> (i32, i32) {
    %c0_i32 = arith.constant 0 : i32
    %c0_i32_0 = arith.constant 0 : i32
    %c0_i32_1 = arith.constant 0 : i32
    return %c0_i32, %c0_i32_0 : i32, i32
  }
  func.func @transform_4(%arg0: i32) -> (i32, i32) {
    %c0_i32 = arith.constant 0 : i32
    %c0_i32_0 = arith.constant 0 : i32
    %c0_i32_1 = arith.constant 0 : i32
    return %c0_i32, %c0_i32_0 : i32, i32
  }
  func.func @transform_5(%arg0: i32) -> (i32, i32) {
    %c0_i32 = arith.constant 0 : i32
    %c0_i32_0 = arith.constant 0 : i32
    %c0_i32_1 = arith.constant 0 : i32
    return %c0_i32, %c0_i32_0 : i32, i32
  }
  func.func @transform_6(%arg0: i32) -> (i32, i32) {
    %c0_i32 = arith.constant 0 : i32
    %c0_i32_0 = arith.constant 0 : i32
    %c0_i32_1 = arith.constant 0 : i32
    return %c0_i32, %c0_i32_0 : i32, i32
  }
  func.func @transform_7(%arg0: i32) -> (i32, i32) {
    %c0_i32 = arith.constant 0 : i32
    %c0_i32_0 = arith.constant 0 : i32
    return %arg0, %c0_i32 : i32, i32
  }
}

</mosaic_0001>

<llo_original>
// kernel: sac_forward.1
$region0: #{sac_forward.1}
  #allocation0 [shape = 'u32[]', space=smem, size = 0x4, offset = 0x4, fixed_abs, tag = 'smem constant byte address 0x4 - core index']
  #allocation1 [shape = 'u32[144,128]{1,0:T(1,128)}', space=vmem, size = 0x12000, scoped, tag = 'internal scratch']
  %s0 = inlined_call_operand.vmem [shape: f32[16,32], index: 0, kind: input, shape index: {}]
  %s1 = inlined_call_operand.vmem [shape: bf16[32,128], index: 1, kind: input, shape index: {}]
  %s2 = inlined_call_operand.vmem [shape: f32[1,128], index: 2, kind: input, shape index: {}]
  %s3 = inlined_call_operand.hbm [shape: bf16[128,128], index: 3, kind: input, shape index: {}]
  %s4 = inlined_call_operand.vmem [shape: f32[1,128], index: 4, kind: input, shape index: {}]
  %s5 = inlined_call_operand.hbm [shape: bf16[128,128], index: 5, kind: input, shape index: {}]
  %s6 = inlined_call_operand.vmem [shape: f32[1,128], index: 6, kind: input, shape index: {}]
  %s7 = inlined_call_operand.vmem [shape: f32[16,8], index: 7, kind: output, shape index: {}]
  %s8 = sld [smem:[#allocation0]]
  $region46: #{sac_forward.1} parent=0
    _
  %s10 = ssub.s32 1, %s8
  %s11 = scalar_select 0, %s10, %s8
  $region1: #{sac_forward.1} parent=0
    #allocation2 [shape = 'u8[32768]{0}', space=vmem, size = 0x8000, scoped, tag = 'input window, operand 3, single buffered']
    #allocation3 [shape = 's32[1]{0}', space=sflag, size = 0x4, scoped, tag = 'scoped memory for sac_forward.1']
    #allocation4 [shape = 'u8[32768]{0}', space=vmem, size = 0x8000, scoped, tag = 'input window, operand 5, single buffered']
    #allocation5 [shape = 's32[1]{0}', space=sflag, size = 0x4, scoped, tag = 'scoped memory for sac_forward.1']
    %12 = vsyncpa [#allocation3], 0
    %13 = vsyncpa [#allocation5], 0
    // Predicated region
    $region2: #{sac_forward.1} parent=1 // pred_check
      _
    $region3: #{sac_forward.1} parent=1 // pred_check_branch
      %15 = sbr.rel (0) target = $region5
    $region4: #{sac_forward.1} parent=1 // pred_region
      _
    $region5: #{sac_forward.1} parent=1 // pred_fallthru
      _
    // Predicated region
    $region6: #{sac_forward.1} parent=1 // pred_check
      _
    $region7: #{sac_forward.1} parent=1 // pred_check_branch
      %17 = sbr.rel (0) target = $region9
    $region8: #{sac_forward.1} parent=1 // pred_region
      _
    $region9: #{sac_forward.1} parent=1 // pred_fallthru
      _
    // Predicated region
    $region10: #{sac_forward.1} parent=1 // pred_check
      _
    $region11: #{sac_forward.1} parent=1 // pred_check_branch
      %19 = sbr.rel (0) target = $region13
    $region12: #{sac_forward.1} parent=1 // pred_region
      _
    $region13: #{sac_forward.1} parent=1 // pred_fallthru
      _
    // Predicated region
    $region14: #{sac_forward.1} parent=1 // pred_check
      _
    $region15: #{sac_forward.1} parent=1 // pred_check_branch
      %21 = sbr.rel (0) target = $region17
    $region16: #{sac_forward.1} parent=1 // pred_region
      %s23 = ssub.s32 1024, 1024
      %24 = vsyncadd [#allocation3], %s23
      %s25 = sshll.u32 [#allocation2], 4
      %s26 = int_to_ptr.vmem [resolvable:$true] %s25
      %31 = dma.hbm_to_vmem [thread:$0]  %s3, 1024, %s26, [#allocation3], 64, 64, 4
    $region17: #{sac_forward.1} parent=1 // pred_fallthru
      _
    // Predicated region
    $region18: #{sac_forward.1} parent=1 // pred_check
      _
    $region19: #{sac_forward.1} parent=1 // pred_check_branch
      %33 = sbr.rel (0) target = $region21
    $region20: #{sac_forward.1} parent=1 // pred_region
      _
    $region21: #{sac_forward.1} parent=1 // pred_fallthru
      _
    // Predicated region
    $region22: #{sac_forward.1} parent=1 // pred_check
      _
    $region23: #{sac_forward.1} parent=1 // pred_check_branch
      %35 = sbr.rel (0) target = $region25
    $region24: #{sac_forward.1} parent=1 // pred_region
      %s37 = ssub.s32 1024, 1024
      %38 = vsyncadd [#allocation5], %s37
      %s39 = sshll.u32 [#allocation4], 4
      %s40 = int_to_ptr.vmem [resolvable:$true] %s39
      %45 = dma.hbm_to_vmem [thread:$0]  %s5, 1024, %s40, [#allocation5], 64, 64, 4
    $region25: #{sac_forward.1} parent=1 // pred_fallthru
      _
    // Predicated region
    $region26: #{sac_forward.1} parent=1 // pred_check
      _
    $region27: #{sac_forward.1} parent=1 // pred_check_branch
      %47 = sbr.rel (0) target = $region29
    $region28: #{sac_forward.1} parent=1 // pred_region
      _
    $region29: #{sac_forward.1} parent=1 // pred_fallthru
      _
    // Predicated region
    $region30: #{sac_forward.1} parent=1 // pred_check
      _
    $region31: #{sac_forward.1} parent=1 // pred_check_branch
      %49 = sbr.rel (0) target = $region33
    $region32: #{sac_forward.1} parent=1 // pred_region
      %50 = dma.done [#allocation3], 1024
    $region33: #{sac_forward.1} parent=1 // pred_fallthru
      _
    // Predicated region
    $region34: #{sac_forward.1} parent=1 // pred_check
      _
    $region35: #{sac_forward.1} parent=1 // pred_check_branch
      %52 = sbr.rel (0) target = $region37
    $region36: #{sac_forward.1} parent=1 // pred_region
      %53 = dma.done [#allocation5], 1024
    $region37: #{sac_forward.1} parent=1 // pred_fallthru
      _
    %v55 = vld [vmem:[%s0] sm:$0xff]
    %v56 = vld [vmem:[%s0 + $0x8] sm:$0xff]
    %v57 = vpack.c.bf16 %v56, %v55
    %v58 = vld [vmem:[%s1] sm:$0xf]
    %v59 = vld [vmem:[%s1 + $0x4] sm:$0xf]
    %v60 = vld [vmem:[%s1 + $0x8] sm:$0xf]
    %v61 = vld [vmem:[%s1 + $0xc] sm:$0xf]
    %v62 = vld [vmem:[%s2] sm:$0x1]
    %v64 = vlaneseq
    %v65 = vshrl.u32 %v64, 7
    %v66 = vsub.s32 0, %v65
    %v67 = vrot.slane %v62, %v66
    %v73 = vunpack.c.l.b16 %v58
    %v74 = vunpack.c.l.b16 %v59
    %v75 = vunpack.c.l.b16 %v60
    %v76 = vunpack.c.l.b16 %v61
    %v77 = vpack.c.b16 %v74, %v73
    %v78 = vpack.c.b16 %v76, %v75
    %vm81 = vcmask 261120
    %v83 = vsel %vm81, %v57, 0
    %85 = vmatprep.subr.bf16.mxu0 0
    %86 = vmatpush1.bf16.msra.mxu0 %v77
    %87 = vmatprep.subr.bf16.mxu0 0
    %88 = vmatpush1.bf16.msra.mxu0 %v78
    %89 = vmatprep.subr.bf16.mxu0 0
    %90 = vmatpush1.bf16.msra.mxu0 0
    %91 = vmatprep.subr.bf16.mxu0 0
    %92 = vmatpush1.bf16.msra.mxu0 0
    %93 = vmatprep.subr.bf16.mxu0 0
    %94 = vmatpush1.bf16.msra.mxu0 0
    %95 = vmatprep.subr.bf16.mxu0 0
    %96 = vmatpush1.bf16.msra.mxu0 0
    %97 = vmatprep.subr.bf16.mxu0 0
    %98 = vmatpush1.bf16.msra.mxu0 0
    %99 = vmatprep.subr.bf16.mxu0 0
    %100 = vmatpush1.bf16.msra.mxu0 0
    %101 = vmatprep.subr.bf16.mxu0 0
    %102 = vmatpush1.bf16.msra.mxu0 0
    %103 = vmatprep.subr.bf16.mxu0 0
    %104 = vmatpush1.bf16.msra.mxu0 0
    %105 = vmatprep.subr.bf16.mxu0 0
    %106 = vmatpush1.bf16.msra.mxu0 0
    %107 = vmatprep.subr.bf16.mxu0 0
    %108 = vmatpush1.bf16.msra.mxu0 0
    %109 = vmatprep.subr.bf16.mxu0 0
    %110 = vmatpush1.bf16.msra.mxu0 0
    %111 = vmatprep.subr.bf16.mxu0 0
    %112 = vmatpush1.bf16.msra.mxu0 0
    %113 = vmatprep.subr.bf16.mxu0 0
    %114 = vmatpush1.bf16.msra.mxu0 0
    %115 = vmatprep.subr.bf16.mxu0 0
    %116 = vmatpush1.bf16.msra.mxu0 0
    %117 = vmatprep.mubr.bf16.mxu0 0
    %118 = vmatmul.mubr.bf16.gmra.mrb[0].mxu0 %v83
    %v119 = vpop.f32.mrb[0].mxu0
    %v120 = vadd.f32 %v67, %v119
    %v121 = vpop.f32.mrb[0].mxu0
    %v122 = vpop.f32.mrb[0].mxu0
    %v123 = vadd.f32 %v67, %v122
    %v124 = vpop.f32.mrb[0].mxu0
    %125 = vdwg.mxu0
    %v126 = vmax.f32 %v120, 0.0
    %v127 = vmax.f32 %v123, 0.0
    %v128 = vpack.c.bf16 %v127, %v126
    %v129 = vld [vmem:[#allocation2] sm:$0xf]
    %v130 = vld [vmem:[#allocation2 + $0x4] sm:$0xf]
    %v131 = vld [vmem:[#allocation2 + $0x8] sm:$0xf]
    %v132 = vld [vmem:[#allocation2 + $0xc] sm:$0xf]
    %v133 = vld [vmem:[#allocation2 + $0x10] sm:$0xf]
    %v134 = vld [vmem:[#allocation2 + $0x14] sm:$0xf]
    %v135 = vld [vmem:[#allocation2 + $0x18] sm:$0xf]
    %v136 = vld [vmem:[#allocation2 + $0x1c] sm:$0xf]
    %v137 = vld [vmem:[#allocation2 + $0x20] sm:$0xf]
    %v138 = vld [vmem:[#allocation2 + $0x24] sm:$0xf]
    %v139 = vld [vmem:[#allocation2 + $0x28] sm:$0xf]
    %v140 = vld [vmem:[#allocation2 + $0x2c] sm:$0xf]
    %v141 = vld [vmem:[#allocation2 + $0x30] sm:$0xf]
    %v142 = vld [vmem:[#allocation2 + $0x34] sm:$0xf]
    %v143 = vld [vmem:[#allocation2 + $0x38] sm:$0xf]
    %v144 = vld [vmem:[#allocation2 + $0x3c] sm:$0xf]
    %v145 = vld [vmem:[%s4] sm:$0x1]
    %v147 = vlaneseq
    %v148 = vshrl.u32 %v147, 7
    %v149 = vsub.s32 0, %v148
    %v150 = vrot.slane %v145, %v149
    %v168 = vunpack.c.l.b16 %v129
    %v169 = vunpack.c.l.b16 %v130
    %v170 = vunpack.c.l.b16 %v131
    %v171 = vunpack.c.l.b16 %v132
    %v172 = vunpack.c.l.b16 %v133
    %v173 = vunpack.c.l.b16 %v134
    %v174 = vunpack.c.l.b16 %v135
    %v175 = vunpack.c.l.b16 %v136
    %v176 = vunpack.c.l.b16 %v137
    %v177 = vunpack.c.l.b16 %v138
    %v178 = vunpack.c.l.b16 %v139
    %v179 = vunpack.c.l.b16 %v140
    %v180 = vunpack.c.l.b16 %v141
    %v181 = vunpack.c.l.b16 %v142
    %v182 = vunpack.c.l.b16 %v143
    %v183 = vunpack.c.l.b16 %v144
    %v184 = vpack.c.b16 %v169, %v168
    %v185 = vpack.c.b16 %v171, %v170
    %v186 = vpack.c.b16 %v173, %v172
    %v187 = vpack.c.b16 %v175, %v174
    %v188 = vpack.c.b16 %v177, %v176
    %v189 = vpack.c.b16 %v179, %v178
    %v190 = vpack.c.b16 %v181, %v180
    %v191 = vpack.c.b16 %v183, %v182
    %200 = vmatprep.subr.bf16.mxu0 0
    %201 = vmatpush1.bf16.msra.mxu0 %v184
    %202 = vmatprep.subr.bf16.mxu0 0
    %203 = vmatpush1.bf16.msra.mxu0 %v185
    %204 = vmatprep.subr.bf16.mxu0 0
    %205 = vmatpush1.bf16.msra.mxu0 %v186
    %206 = vmatprep.subr.bf16.mxu0 0
    %207 = vmatpush1.bf16.msra.mxu0 %v187
    %208 = vmatprep.subr.bf16.mxu0 0
    %209 = vmatpush1.bf16.msra.mxu0 %v188
    %210 = vmatprep.subr.bf16.mxu0 0
    %211 = vmatpush1.bf16.msra.mxu0 %v189
    %212 = vmatprep.subr.bf16.mxu0 0
    %213 = vmatpush1.bf16.msra.mxu0 %v190
    %214 = vmatprep.subr.bf16.mxu0 0
    %215 = vmatpush1.bf16.msra.mxu0 %v191
    %216 = vmatprep.subr.bf16.mxu0 0
    %217 = vmatpush1.bf16.msra.mxu0 0
    %218 = vmatprep.subr.bf16.mxu0 0
    %219 = vmatpush1.bf16.msra.mxu0 0
    %220 = vmatprep.subr.bf16.mxu0 0
    %221 = vmatpush1.bf16.msra.mxu0 0
    %222 = vmatprep.subr.bf16.mxu0 0
    %223 = vmatpush1.bf16.msra.mxu0 0
    %224 = vmatprep.subr.bf16.mxu0 0
    %225 = vmatpush1.bf16.msra.mxu0 0
    %226 = vmatprep.subr.bf16.mxu0 0
    %227 = vmatpush1.bf16.msra.mxu0 0
    %228 = vmatprep.subr.bf16.mxu0 0
    %229 = vmatpush1.bf16.msra.mxu0 0
    %230 = vmatprep.subr.bf16.mxu0 0
    %231 = vmatpush1.bf16.msra.mxu0 0
    %232 = vmatprep.mubr.bf16.mxu0 0
    %233 = vmatmul.mubr.bf16.gmra.mrb[0].mxu0 %v128
    %v234 = vpop.f32.mrb[0].mxu0
    %v235 = vadd.f32 %v150, %v234
    %v236 = vpop.f32.mrb[0].mxu0
    %v237 = vpop.f32.mrb[0].mxu0
    %v238 = vadd.f32 %v150, %v237
    %v239 = vpop.f32.mrb[0].mxu0
    %240 = vdwg.mxu0
    %v241 = vmax.f32 %v235, 0.0
    %v242 = vmax.f32 %v238, 0.0
    %v243 = vpack.c.bf16 %v242, %v241
    %v244 = vld [vmem:[#allocation4] sm:$0xf]
    %v245 = vld [vmem:[#allocation4 + $0x4] sm:$0xf]
    %v246 = vld [vmem:[#allocation4 + $0x8] sm:$0xf]
    %v247 = vld [vmem:[#allocation4 + $0xc] sm:$0xf]
    %v248 = vld [vmem:[#allocation4 + $0x10] sm:$0xf]
    %v249 = vld [vmem:[#allocation4 + $0x14] sm:$0xf]
    %v250 = vld [vmem:[#allocation4 + $0x18] sm:$0xf]
    %v251 = vld [vmem:[#allocation4 + $0x1c] sm:$0xf]
    %v252 = vld [vmem:[#allocation4 + $0x20] sm:$0xf]
    %v253 = vld [vmem:[#allocation4 + $0x24] sm:$0xf]
    %v254 = vld [vmem:[#allocation4 + $0x28] sm:$0xf]
    %v255 = vld [vmem:[#allocation4 + $0x2c] sm:$0xf]
    %v256 = vld [vmem:[#allocation4 + $0x30] sm:$0xf]
    %v257 = vld [vmem:[#allocation4 + $0x34] sm:$0xf]
    %v258 = vld [vmem:[#allocation4 + $0x38] sm:$0xf]
    %v259 = vld [vmem:[#allocation4 + $0x3c] sm:$0xf]
    %v260 = vld [vmem:[%s6] sm:$0x1]
    %v262 = vlaneseq
    %v263 = vshrl.u32 %v262, 7
    %v264 = vsub.s32 0, %v263
    %v265 = vrot.slane %v260, %v264
    %v283 = vunpack.c.l.b16 %v244
    %v284 = vunpack.c.l.b16 %v245
    %v285 = vunpack.c.l.b16 %v246
    %v286 = vunpack.c.l.b16 %v247
    %v287 = vunpack.c.l.b16 %v248
    %v288 = vunpack.c.l.b16 %v249
    %v289 = vunpack.c.l.b16 %v250
    %v290 = vunpack.c.l.b16 %v251
    %v291 = vunpack.c.l.b16 %v252
    %v292 = vunpack.c.l.b16 %v253
    %v293 = vunpack.c.l.b16 %v254
    %v294 = vunpack.c.l.b16 %v255
    %v295 = vunpack.c.l.b16 %v256
    %v296 = vunpack.c.l.b16 %v257
    %v297 = vunpack.c.l.b16 %v258
    %v298 = vunpack.c.l.b16 %v259
    %v299 = vpack.c.b16 %v284, %v283
    %v300 = vpack.c.b16 %v286, %v285
    %v301 = vpack.c.b16 %v288, %v287
    %v302 = vpack.c.b16 %v290, %v289
    %v303 = vpack.c.b16 %v292, %v291
    %v304 = vpack.c.b16 %v294, %v293
    %v305 = vpack.c.b16 %v296, %v295
    %v306 = vpack.c.b16 %v298, %v297
    %315 = vmatprep.subr.bf16.mxu0 0
    %316 = vmatpush1.bf16.msra.mxu0 %v299
    %317 = vmatprep.subr.bf16.mxu0 0
    %318 = vmatpush1.bf16.msra.mxu0 %v300
    %319 = vmatprep.subr.bf16.mxu0 0
    %320 = vmatpush1.bf16.msra.mxu0 %v301
    %321 = vmatprep.subr.bf16.mxu0 0
    %322 = vmatpush1.bf16.msra.mxu0 %v302
    %323 = vmatprep.subr.bf16.mxu0 0
    %324 = vmatpush1.bf16.msra.mxu0 %v303
    %325 = vmatprep.subr.bf16.mxu0 0
    %326 = vmatpush1.bf16.msra.mxu0 %v304
    %327 = vmatprep.subr.bf16.mxu0 0
    %328 = vmatpush1.bf16.msra.mxu0 %v305
    %329 = vmatprep.subr.bf16.mxu0 0
    %330 = vmatpush1.bf16.msra.mxu0 %v306
    %331 = vmatprep.subr.bf16.mxu0 0
    %332 = vmatpush1.bf16.msra.mxu0 0
    %333 = vmatprep.subr.bf16.mxu0 0
    %334 = vmatpush1.bf16.msra.mxu0 0
    %335 = vmatprep.subr.bf16.mxu0 0
    %336 = vmatpush1.bf16.msra.mxu0 0
    %337 = vmatprep.subr.bf16.mxu0 0
    %338 = vmatpush1.bf16.msra.mxu0 0
    %339 = vmatprep.subr.bf16.mxu0 0
    %340 = vmatpush1.bf16.msra.mxu0 0
    %341 = vmatprep.subr.bf16.mxu0 0
    %342 = vmatpush1.bf16.msra.mxu0 0
    %343 = vmatprep.subr.bf16.mxu0 0
    %344 = vmatpush1.bf16.msra.mxu0 0
    %345 = vmatprep.subr.bf16.mxu0 0
    %346 = vmatpush1.bf16.msra.mxu0 0
    %347 = vmatprep.mubr.bf16.mxu0 0
    %348 = vmatmul.mubr.bf16.gmra.mrb[0].mxu0 %v243
    %v349 = vpop.f32.mrb[0].mxu0
    %v350 = vadd.f32 %v265, %v349
    %v351 = vpop.f32.mrb[0].mxu0
    %v352 = vpop.f32.mrb[0].mxu0
    %v353 = vadd.f32 %v265, %v352
    %v354 = vpop.f32.mrb[0].mxu0
    %355 = vdwg.mxu0
    %356 = vmax.xlane.f32.xlu0 %v350
    %v357 = vpop.xlane.xlu0 %356
    %358 = vmax.xlane.f32.xlu0 %v353
    %v359 = vpop.xlane.xlu0 %358
    %v360 = vsub.f32 %v350, %v357
    %v361 = vsub.f32 %v353, %v359
    %v362 = vmul.f32 %v360, 1.442695
    %v363 = vpow.pop %v362
    %v364 = vmul.f32 %v361, 1.442695
    %v365 = vpow.pop %v364
    %366 = vadd.xlane.f32.xlu0 %v363
    %v367 = vpop.xlane.xlu0 %366
    %368 = vadd.xlane.f32.xlu0 %v365
    %v369 = vpop.xlane.xlu0 %368
    %v370 = vrcp.pop %v367
    %v371 = vmul.f32 %v363, %v370
    %v372 = vrcp.pop %v369
    %v373 = vmul.f32 %v365, %v372
    %vm374 = vcmask 64512
    %375 = vst.msk [vmem:[%s7] sm:$0xff] %vm374, %v371
    %376 = vst.msk [vmem:[%s7 + $0x8] sm:$0xff] %vm374, %v373
    // Predicated region
    $region38: #{sac_forward.1} parent=1 // pred_check
      _
    $region39: #{sac_forward.1} parent=1 // pred_check_branch
      %378 = sbr.rel (0) target = $region41
    $region40: #{sac_forward.1} parent=1 // pred_region
      _
    $region41: #{sac_forward.1} parent=1 // pred_fallthru
      _
    // Predicated region
    $region42: #{sac_forward.1} parent=1 // pred_check
      _
    $region43: #{sac_forward.1} parent=1 // pred_check_branch
      %380 = sbr.rel (0) target = $region45
    $region44: #{sac_forward.1} parent=1 // pred_region
      _
    $region45: #{sac_forward.1} parent=1 // pred_fallthru
      _
    %381 = vsyncpa [#allocation3], 1
    %382 = vsyncpa [#allocation5], 1

</llo_original>
